<compile_context>
chip_gen: v5e
topology: v5e:2x2
jax: 0.10.0
libtpu: 0.0.40
codegen_flags: <defaults>
</compile_context>

<pallas_src>
import functools

import jax
import jax.numpy as jnp
from jax.experimental import pallas as pl
from jax.experimental.pallas import tpu as pltpu

_LANES = 128


def _se_block_kernel(x_ref, w1_ref, b1_ref, w2_ref, b2_ref, o_ref, *, inv_hw):
    # x_ref, o_ref : (Bt, C, HWp)  -- one block of Bt images per grid step
    # w1_ref : (C, Cr) = fc1.weight.T    b1_ref : (1, Cr)
    # w2_ref : (C, Cr) = fc2.weight      b2_ref : (C, 1)

    # ---- Squeeze: global average pool over HW (single lane reduce per row).
    # Padded lanes are zero, so sum * (1/true_HW) is exact.
    pooled = jnp.sum(x_ref[...].astype(jnp.float32), axis=-1, keepdims=True) * inv_hw  # (Bt,C,1)

    # ---- Excitation: fc1 -> relu -> fc2 -> sigmoid (tiny; kept off the MXU).
    # h[b, j] = relu(sum_c pooled[b, c] * w1[c, j] + b1[j])          -> (Bt, 1, Cr)
    h = jnp.sum(pooled * w1_ref[...][None, :, :], axis=1, keepdims=True) \
        + b1_ref[...][None, :, :]
    h = jnp.maximum(h, 0.0)
    # s[b, c] = sigmoid(sum_j h[b, j] * w2[c, j] + b2[c])            -> (Bt, C, 1)
    s = jnp.sum(h * w2_ref[...][None, :, :], axis=-1, keepdims=True) \
        + b2_ref[...][None, :, :]
    s = jax.nn.sigmoid(s)

    # ---- Scale: whole-slab multiply; gate broadcasts along lanes.
    # Re-read x from VMEM (cheap) rather than holding the slab live above.
    o_ref[...] = (x_ref[...].astype(jnp.float32) * s).astype(o_ref.dtype)


def _vmem_budget_bytes():
    """Generation-aware VMEM budget: physical capacity minus headroom."""
    try:
        cap = int(pltpu.get_tpu_info().vmem_capacity_bytes)
    except Exception:
        cap = 64 * 1024 * 1024  # conservative (v7x-sized) fallback
    return max(cap - 16 * 1024 * 1024, 32 * 1024 * 1024)


def se_block_ref(x, w1, b1, w2, b2):
    """Pure-JAX reference mirroring the PyTorch forward (same param layouts)."""
    y = jnp.mean(x, axis=(2, 3))                  # adaptive_avg_pool2d(x,1).view(B,C)
    y = jax.nn.relu(y @ w1 + b1)                  # fc1 + relu
    y = jax.nn.sigmoid(y @ w2.T + b2.T)           # fc2 + sigmoid
    return x * y[:, :, None, None]


def se_block(x, w1, b1, w2, b2):
    """x: (B, C, H, W).
       w1: (C, Cr) [fc1.weight.T], b1: (1, Cr),
       w2: (C, Cr) [fc2.weight],   b2: (C, 1)."""
    B, C, H, W = x.shape
    HW = H * W
    Cr = w1.shape[1]
    itemsize = x.dtype.itemsize

    # Lane-dense layout: spatial on lanes; pad HW to a multiple of 128 so the
    # stores are full-lane (avoids the masked vst.msk slow path for HW=49/196...).
    x3 = x.reshape(B, C, HW)
    HWp = HW if HW % _LANES == 0 else ((HW + _LANES - 1) // _LANES) * _LANES
    if HWp != HW:
        x3 = jnp.pad(x3, ((0, 0), (0, 0), (0, HWp - HW)))

    per_image_bytes = C * HWp * itemsize
    weight_bytes = (w1.size + b1.size + w2.size + b2.size) * w1.dtype.itemsize
    vmem_budget = _vmem_budget_bytes()

    # Images per grid step: aim for ~1 MB tiles, bounded by what fits the
    # double-buffered (2x in + 2x out) VMEM budget alongside resident weights.
    fit_cap = (vmem_budget - weight_bytes - (1 << 20)) // (4 * per_image_bytes)
    if fit_cap < 1:
        # TODO(synk): single image exceeds the VMEM budget; the HW-split
        # two-pass pooled-gate kernel is not implemented, fall back to XLA.
        return se_block_ref(x, w1, b1, w2, b2)
    target_tile = 1 << 20
    bt_cap = int(min(B, fit_cap, max(target_tile // per_image_bytes, 1)))
    Bt = max(d for d in range(1, bt_cap + 1) if B % d == 0)
    n_steps = B // Bt

    vmem_needed = 4 * Bt * per_image_bytes + weight_bytes + (1 << 20)
    vmem_limit = int(min(max(vmem_needed, 32 * 1024 * 1024), vmem_budget))

    cost = pl.CostEstimate(
        flops=2 * B * C * HW + 4 * B * C * Cr,
        transcendentals=B * C,
        bytes_accessed=2 * B * C * HWp * itemsize + weight_bytes,
    )

    kernel = functools.partial(_se_block_kernel, inv_hw=1.0 / HW)

    out = pl.pallas_call(
        kernel,
        out_shape=jax.ShapeDtypeStruct((B, C, HWp), x.dtype),
        grid=(n_steps,),
        in_specs=[
            pl.BlockSpec((Bt, C, HWp), lambda b: (b, 0, 0)),   # x: Bt images / step
            pl.BlockSpec(w1.shape, lambda b: (0, 0)),          # weights: constant
            pl.BlockSpec(b1.shape, lambda b: (0, 0)),          #   block index ->
            pl.BlockSpec(w2.shape, lambda b: (0, 0)),          #   DMA'd once,
            pl.BlockSpec(b2.shape, lambda b: (0, 0)),          #   VMEM-resident
        ],
        out_specs=pl.BlockSpec((Bt, C, HWp), lambda b: (b, 0, 0)),
        compiler_params=pltpu.CompilerParams(
            dimension_semantics=("parallel",) if n_steps > 1 else ("arbitrary",),
            vmem_limit_bytes=vmem_limit,
        ),
        cost_estimate=cost,
    )(x3, w1, b1, w2, b2)

    if HWp != HW:
        out = out[:, :, :HW]
    return out.reshape(B, C, H, W)


if __name__ == "__main__":
    # Shapes consistent with SEBlock(channels=32, reduction=16)
    B, C, H, W = 2, 32, 16, 16
    reduction = 16
    Cr = C // reduction                            # 2

    key = jax.random.PRNGKey(0)
    kx, k1, k2, k3, k4 = jax.random.split(key, 5)

    x = jax.random.normal(kx, (B, C, H, W), dtype=jnp.float32)

    # Kernel parameter layouts:
    #   w1 = fc1.weight.T  -> (C, Cr),  b1 -> (1, Cr)
    #   w2 = fc2.weight    -> (C, Cr),  b2 -> (C, 1)
    w1 = jax.random.normal(k1, (C, Cr), dtype=jnp.float32) * 0.1
    b1 = jax.random.normal(k2, (1, Cr), dtype=jnp.float32) * 0.1
    w2 = jax.random.normal(k3, (C, Cr), dtype=jnp.float32) * 0.1
    b2 = jax.random.normal(k4, (C, 1), dtype=jnp.float32) * 0.1

    out = jax.block_until_ready(se_block(x, w1, b1, w2, b2))
    ref = jax.block_until_ready(se_block_ref(x, w1, b1, w2, b2))

    assert out.shape == (B, C, H, W)
    assert jnp.max(jnp.abs(out - ref)) < 1e-5, "mismatch vs reference"

    print("KERNEL_OK")
</pallas_src>

<mosaic_0001>
module attributes {stable_mosaic.version = 11 : i64} {
  func.func @_se_block_kernel(%arg0: i32, %arg1: memref<2x32x256xf32, #tpu.memory_space<vmem>>, %arg2: memref<32x2xf32, #tpu.memory_space<vmem>>, %arg3: memref<1x2xf32, #tpu.memory_space<vmem>>, %arg4: memref<32x2xf32, #tpu.memory_space<vmem>>, %arg5: memref<32x1xf32, #tpu.memory_space<vmem>>, %arg6: memref<2x32x256xf32, #tpu.memory_space<vmem>>) attributes {dimension_semantics = [#tpu.dimension_semantics<arbitrary>], iteration_bounds = array<i64: 1>, scalar_prefetch = 0 : i64, scratch_operands = 0 : i64, tpu.core_type = #tpu.core_type<tc>, window_params = [{transform_indices = @transform_0, window_bounds = array<i64: 2, 32, 256>}, {pipeline_mode = #tpu.pipeline_mode<synchronous>, transform_indices = @transform_1, window_bounds = array<i64: 32, 2>}, {pipeline_mode = #tpu.pipeline_mode<synchronous>, transform_indices = @transform_2, window_bounds = array<i64: 1, 2>}, {pipeline_mode = #tpu.pipeline_mode<synchronous>, transform_indices = @transform_3, window_bounds = array<i64: 32, 2>}, {pipeline_mode = #tpu.pipeline_mode<synchronous>, transform_indices = @transform_4, window_bounds = array<i64: 32, 1>}, {transform_indices = @transform_5, window_bounds = array<i64: 2, 32, 256>}]} {
    %c0 = arith.constant 0 : index
    %c0_0 = arith.constant 0 : index
    %c0_1 = arith.constant 0 : index
    %0 = vector.load %arg1[%c0, %c0_0, %c0_1] : memref<2x32x256xf32, #tpu.memory_space<vmem>>, vector<2x32x256xf32>
    %cst = arith.constant dense<0.000000e+00> : vector<2x32xf32>
    %1 = vector.multi_reduction <add>, %0, %cst [2] : vector<2x32x256xf32> to vector<2x32xf32>
    %2 = vector.shape_cast %1 : vector<2x32xf32> to vector<2x32x1xf32>
    %cst_2 = arith.constant 3.906250e-03 : f32
    %3 = vector.broadcast %cst_2 : f32 to vector<2x32x1xf32>
    %4 = arith.mulf %2, %3 : vector<2x32x1xf32>
    %c0_3 = arith.constant 0 : index
    %c0_4 = arith.constant 0 : index
    %5 = vector.load %arg2[%c0_3, %c0_4] : memref<32x2xf32, #tpu.memory_space<vmem>>, vector<32x2xf32>
    %6 = vector.shape_cast %5 : vector<32x2xf32> to vector<1x32x2xf32>
    %7 = vector.broadcast %4 : vector<2x32x1xf32> to vector<2x32x2xf32>
    %8 = vector.broadcast %6 : vector<1x32x2xf32> to vector<2x32x2xf32>
    %9 = arith.mulf %7, %8 : vector<2x32x2xf32>
    %cst_5 = arith.constant dense<0.000000e+00> : vector<2x2xf32>
    %10 = vector.multi_reduction <add>, %9, %cst_5 [1] : vector<2x32x2xf32> to vector<2x2xf32>
    %11 = vector.shape_cast %10 : vector<2x2xf32> to vector<2x1x2xf32>
    %c0_6 = arith.constant 0 : index
    %c0_7 = arith.constant 0 : index
    %12 = vector.load %arg3[%c0_6, %c0_7] : memref<1x2xf32, #tpu.memory_space<vmem>>, vector<1x2xf32>
    %13 = vector.shape_cast %12 : vector<1x2xf32> to vector<1x1x2xf32>
    %14 = vector.broadcast %13 : vector<1x1x2xf32> to vector<2x1x2xf32>
    %15 = arith.addf %11, %14 : vector<2x1x2xf32>
    %cst_8 = arith.constant 0.000000e+00 : f32
    %16 = vector.broadcast %cst_8 : f32 to vector<2x1x2xf32>
    %17 = arith.maximumf %15, %16 : vector<2x1x2xf32>
    %c0_9 = arith.constant 0 : index
    %c0_10 = arith.constant 0 : index
    %18 = vector.load %arg4[%c0_9, %c0_10] : memref<32x2xf32, #tpu.memory_space<vmem>>, vector<32x2xf32>
    %19 = vector.shape_cast %18 : vector<32x2xf32> to vector<1x32x2xf32>
    %20 = vector.broadcast %17 : vector<2x1x2xf32> to vector<2x32x2xf32>
    %21 = vector.broadcast %19 : vector<1x32x2xf32> to vector<2x32x2xf32>
    %22 = arith.mulf %20, %21 : vector<2x32x2xf32>
    %cst_11 = arith.constant dense<0.000000e+00> : vector<2x32xf32>
    %23 = vector.multi_reduction <add>, %22, %cst_11 [2] : vector<2x32x2xf32> to vector<2x32xf32>
    %24 = vector.shape_cast %23 : vector<2x32xf32> to vector<2x32x1xf32>
    %c0_12 = arith.constant 0 : index
    %c0_13 = arith.constant 0 : index
    %25 = vector.load %arg5[%c0_12, %c0_13] : memref<32x1xf32, #tpu.memory_space<vmem>>, vector<32x1xf32>
    %26 = vector.shape_cast %25 : vector<32x1xf32> to vector<1x32x1xf32>
    %27 = vector.broadcast %26 : vector<1x32x1xf32> to vector<2x32x1xf32>
    %28 = arith.addf %24, %27 : vector<2x32x1xf32>
    %29 = arith.negf %28 : vector<2x32x1xf32>
    %30 = math.exp %29 : vector<2x32x1xf32>
    %cst_14 = arith.constant 1.000000e+00 : f32
    %31 = vector.broadcast %cst_14 : f32 to vector<2x32x1xf32>
    %32 = arith.addf %31, %30 : vector<2x32x1xf32>
    %33 = arith.divf %31, %32 : vector<2x32x1xf32>
    %c0_15 = arith.constant 0 : index
    %c0_16 = arith.constant 0 : index
    %c0_17 = arith.constant 0 : index
    %34 = vector.load %arg1[%c0_15, %c0_16, %c0_17] : memref<2x32x256xf32, #tpu.memory_space<vmem>>, vector<2x32x256xf32>
    %35 = vector.broadcast %33 : vector<2x32x1xf32> to vector<2x32x256xf32>
    %36 = arith.mulf %34, %35 : vector<2x32x256xf32>
    %c0_18 = arith.constant 0 : index
    %c0_19 = arith.constant 0 : index
    %c0_20 = arith.constant 0 : index
    %37 = vector.load %arg6[%c0_18, %c0_19, %c0_20] : memref<2x32x256xf32, #tpu.memory_space<vmem>>, vector<2x32x256xf32>
    tpu.vector_store %arg6[%c0_18, %c0_19, %c0_20], %36 {strides = array<i32>} : memref<2x32x256xf32, #tpu.memory_space<vmem>>, vector<2x32x256xf32>,
    return
  }
  func.func @transform_0(%arg0: i32) -> (i32, i32, i32) {
    %c0_i32 = arith.constant 0 : i32
    %c0_i32_0 = arith.constant 0 : i32
    %c0_i32_1 = arith.constant 0 : i32
    return %arg0, %c0_i32, %c0_i32_0 : i32, i32, i32
  }
  func.func @transform_1(%arg0: i32) -> (i32, i32) {
    %c0_i32 = arith.constant 0 : i32
    %c0_i32_0 = arith.constant 0 : i32
    %c0_i32_1 = arith.constant 0 : i32
    return %c0_i32, %c0_i32_0 : i32, i32
  }
  func.func @transform_2(%arg0: i32) -> (i32, i32) {
    %c0_i32 = arith.constant 0 : i32
    %c0_i32_0 = arith.constant 0 : i32
    %c0_i32_1 = arith.constant 0 : i32
    return %c0_i32, %c0_i32_0 : i32, i32
  }
  func.func @transform_3(%arg0: i32) -> (i32, i32) {
    %c0_i32 = arith.constant 0 : i32
    %c0_i32_0 = arith.constant 0 : i32
    %c0_i32_1 = arith.constant 0 : i32
    return %c0_i32, %c0_i32_0 : i32, i32
  }
  func.func @transform_4(%arg0: i32) -> (i32, i32) {
    %c0_i32 = arith.constant 0 : i32
    %c0_i32_0 = arith.constant 0 : i32
    %c0_i32_1 = arith.constant 0 : i32
    return %c0_i32, %c0_i32_0 : i32, i32
  }
  func.func @transform_5(%arg0: i32) -> (i32, i32, i32) {
    %c0_i32 = arith.constant 0 : i32
    %c0_i32_0 = arith.constant 0 : i32
    %c0_i32_1 = arith.constant 0 : i32
    return %arg0, %c0_i32, %c0_i32_0 : i32, i32, i32
  }
}

</mosaic_0001>

<llo_original>
// kernel: tpu_custom_call.1
$region0: #{tpu_custom_call.1}
  #allocation0 [shape = 'u32[]', space=smem, size = 0x4, offset = 0x4, fixed_abs, tag = 'smem constant byte address 0x4 - core index']
  #allocation1 [shape = 'u32[72,128]{1,0:T(1,128)}', space=vmem, size = 0x9000, scoped, tag = 'internal scratch']
  %s0 = inlined_call_operand.hbm [shape: f32[2,32,256], index: 0, kind: input, shape index: {}]
  %s1 = inlined_call_operand.vmem [shape: f32[32,2], index: 1, kind: input, shape index: {}]
  %s2 = inlined_call_operand.vmem [shape: f32[1,2], index: 2, kind: input, shape index: {}]
  %s3 = inlined_call_operand.vmem [shape: f32[32,2], index: 3, kind: input, shape index: {}]
  %s4 = inlined_call_operand.vmem [shape: f32[32,1], index: 4, kind: input, shape index: {}]
  %s5 = inlined_call_operand.hbm [shape: f32[2,32,256], index: 5, kind: output, shape index: {}]
  %s6 = sld [smem:[#allocation0]]
  $region34: #{tpu_custom_call.1} parent=0
    _
  %s8 = ssub.s32 1, %s6
  %s9 = scalar_select 0, %s8, %s6
  $region1: #{tpu_custom_call.1} parent=0
    #allocation2 [shape = 'u8[65536]{0}', space=vmem, size = 0x10000, scoped, tag = 'input window, operand 0, single buffered']
    #allocation3 [shape = 's32[1]{0}', space=sflag, size = 0x4, scoped, tag = 'scoped memory for tpu_custom_call.1']
    #allocation4 [shape = 's32[1]{0}', space=sflag, size = 0x4, scoped, tag = 'scoped memory for tpu_custom_call.1']
    #allocation5 [shape = 'u8[65536]{0}', space=vmem, size = 0x10000, scoped, tag = 'output window, operand 0, single buffered']
    %10 = vsyncpa [#allocation3], 0
    %11 = vsyncpa [#allocation4], 0
    // Predicated region
    $region2: #{tpu_custom_call.1} parent=1 // pred_check
      _
    $region3: #{tpu_custom_call.1} parent=1 // pred_check_branch
      %13 = sbr.rel (0) target = $region5
    $region4: #{tpu_custom_call.1} parent=1 // pred_region
      %15 = vsyncadd [#allocation3], 0
      %s16 = sshll.u32 %s0, 4
      %s17 = int_to_ptr.hbm [resolvable:$true] %s16
      %s18 = sshll.u32 [#allocation2], 4
      %s19 = int_to_ptr.vmem [resolvable:$true] %s18
      %24 = dma.hbm_to_vmem [thread:$0]  %s17, 2048, %s19, [#allocation3], 256, 256, 16
    $region5: #{tpu_custom_call.1} parent=1 // pred_fallthru
      _
    // Predicated region
    $region6: #{tpu_custom_call.1} parent=1 // pred_check
      _
    $region7: #{tpu_custom_call.1} parent=1 // pred_check_branch
      %26 = sbr.rel (0) target = $region9
    $region8: #{tpu_custom_call.1} parent=1 // pred_region
      _
    $region9: #{tpu_custom_call.1} parent=1 // pred_fallthru
      _
    // Predicated region
    $region10: #{tpu_custom_call.1} parent=1 // pred_check
      _
    $region11: #{tpu_custom_call.1} parent=1 // pred_check_branch
      %28 = sbr.rel (0) target = $region13
    $region12: #{tpu_custom_call.1} parent=1 // pred_region
      _
    $region13: #{tpu_custom_call.1} parent=1 // pred_fallthru
      _
    // Predicated region
    $region14: #{tpu_custom_call.1} parent=1 // pred_check
      _
    $region15: #{tpu_custom_call.1} parent=1 // pred_check_branch
      %30 = sbr.rel (0) target = $region17
    $region16: #{tpu_custom_call.1} parent=1 // pred_region
      _
    $region17: #{tpu_custom_call.1} parent=1 // pred_fallthru
      _
    // Predicated region
    $region18: #{tpu_custom_call.1} parent=1 // pred_check
      _
    $region19: #{tpu_custom_call.1} parent=1 // pred_check_branch
      %32 = sbr.rel (0) target = $region21
    $region20: #{tpu_custom_call.1} parent=1 // pred_region
      _
    $region21: #{tpu_custom_call.1} parent=1 // pred_fallthru
      _
    // Predicated region
    $region22: #{tpu_custom_call.1} parent=1 // pred_check
      _
    $region23: #{tpu_custom_call.1} parent=1 // pred_check_branch
      %34 = sbr.rel (0) target = $region25
    $region24: #{tpu_custom_call.1} parent=1 // pred_region
      %36 = dma.done [#allocation3], 2048
    $region25: #{tpu_custom_call.1} parent=1 // pred_fallthru
      _
    %v37 = vld [vmem:[#allocation2] sm:$0xff]
    %v38 = vld [vmem:[#allocation2 + $0x8] sm:$0xff]
    %v39 = vld [vmem:[#allocation2 + $0x10] sm:$0xff]
    %v40 = vld [vmem:[#allocation2 + $0x18] sm:$0xff]
    %v41 = vld [vmem:[#allocation2 + $0x20] sm:$0xff]
    %v42 = vld [vmem:[#allocation2 + $0x28] sm:$0xff]
    %v43 = vld [vmem:[#allocation2 + $0x30] sm:$0xff]
    %v44 = vld [vmem:[#allocation2 + $0x38] sm:$0xff]
    %v45 = vld [vmem:[#allocation2 + $0x40] sm:$0xff]
    %v46 = vld [vmem:[#allocation2 + $0x48] sm:$0xff]
    %v47 = vld [vmem:[#allocation2 + $0x50] sm:$0xff]
    %v48 = vld [vmem:[#allocation2 + $0x58] sm:$0xff]
    %v49 = vld [vmem:[#allocation2 + $0x60] sm:$0xff]
    %v50 = vld [vmem:[#allocation2 + $0x68] sm:$0xff]
    %v51 = vld [vmem:[#allocation2 + $0x70] sm:$0xff]
    %v52 = vld [vmem:[#allocation2 + $0x78] sm:$0xff]
    %v53 = vadd.f32 %v37, %v38
    %54 = vadd.xlane.f32.xlu0 %v53
    %v55 = vpop.xlane.xlu0 %54
    %v56 = vadd.f32 %v39, %v40
    %57 = vadd.xlane.f32.xlu0 %v56
    %v58 = vpop.xlane.xlu0 %57
    %v59 = vadd.f32 %v41, %v42
    %60 = vadd.xlane.f32.xlu0 %v59
    %v61 = vpop.xlane.xlu0 %60
    %v62 = vadd.f32 %v43, %v44
    %63 = vadd.xlane.f32.xlu0 %v62
    %v64 = vpop.xlane.xlu0 %63
    %v65 = vadd.f32 %v45, %v46
    %66 = vadd.xlane.f32.xlu0 %v65
    %v67 = vpop.xlane.xlu0 %66
    %v68 = vadd.f32 %v47, %v48
    %69 = vadd.xlane.f32.xlu0 %v68
    %v70 = vpop.xlane.xlu0 %69
    %v71 = vadd.f32 %v49, %v50
    %72 = vadd.xlane.f32.xlu0 %v71
    %v73 = vpop.xlane.xlu0 %72
    %v74 = vadd.f32 %v51, %v52
    %75 = vadd.xlane.f32.xlu0 %v74
    %v76 = vpop.xlane.xlu0 %75
    %v77 = vmul.f32 %v55, 0.00390625
    %v78 = vmul.f32 %v58, 0.00390625
    %v79 = vmul.f32 %v61, 0.00390625
    %v80 = vmul.f32 %v64, 0.00390625
    %v81 = vmul.f32 %v67, 0.00390625
    %v82 = vmul.f32 %v70, 0.00390625
    %v83 = vmul.f32 %v73, 0.00390625
    %v84 = vmul.f32 %v76, 0.00390625
    %v85 = vld [vmem:[%s1] sm:$0xff]
    %v86 = vld [vmem:[%s1 + $0x8] sm:$0xff]
    %v87 = vld [vmem:[%s1 + $0x10] sm:$0xff]
    %v88 = vld [vmem:[%s1 + $0x18] sm:$0xff]
    %v89 = vmul.f32 %v77, %v85
    %v90 = vmul.f32 %v78, %v86
    %v91 = vmul.f32 %v79, %v87
    %v92 = vmul.f32 %v80, %v88
    %v93 = vmul.f32 %v81, %v85
    %v94 = vmul.f32 %v82, %v86
    %v95 = vmul.f32 %v83, %v87
    %v96 = vmul.f32 %v84, %v88
    %vm97 = vcmask 15360
    %v98 = vsel %vm97, %v89, 0.0
    %v99 = vsel %vm97, %v90, 0.0
    %v100 = vadd.f32 %v98, %v99
    %v101 = vsel %vm97, %v91, 0.0
    %v102 = vadd.f32 %v100, %v101
    %v103 = vsel %vm97, %v92, 0.0
    %v104 = vadd.f32 %v102, %v103
    %v105 = vrot.slane %v104, 4
    %v106 = vadd.f32 %v104, %v105
    %v107 = vrot.slane %v106, 2
    %v108 = vadd.f32 %v106, %v107
    %v109 = vrot.slane %v108, 1
    %v110 = vadd.f32 %v108, %v109
    %v111 = vsel %vm97, %v93, 0.0
    %v112 = vsel %vm97, %v94, 0.0
    %v113 = vadd.f32 %v111, %v112
    %v114 = vsel %vm97, %v95, 0.0
    %v115 = vadd.f32 %v113, %v114
    %v116 = vsel %vm97, %v96, 0.0
    %v117 = vadd.f32 %v115, %v116
    %v118 = vrot.slane %v117, 4
    %v119 = vadd.f32 %v117, %v118
    %v120 = vrot.slane %v119, 2
    %v121 = vadd.f32 %v119, %v120
    %v122 = vrot.slane %v121, 1
    %v123 = vadd.f32 %v121, %v122
    %v124 = vld [vmem:[%s2] sm:$0x1]
    %v125 = vadd.f32 %v110, %v124
    %v126 = vadd.f32 %v123, %v124
    %v127 = vmax.f32 %v125, 0.0
    %v128 = vmax.f32 %v126, 0.0
    %v129 = vld [vmem:[%s3] sm:$0xff]
    %v130 = vld [vmem:[%s3 + $0x8] sm:$0xff]
    %v131 = vld [vmem:[%s3 + $0x10] sm:$0xff]
    %v132 = vld [vmem:[%s3 + $0x18] sm:$0xff]
    %v133 = vperm.slane %v127, 0
    %v134 = vperm.slane %v128, 0
    %v135 = vmul.f32 %v133, %v129
    %v136 = vmul.f32 %v133, %v130
    %v137 = vmul.f32 %v133, %v131
    %v138 = vmul.f32 %v133, %v132
    %v139 = vmul.f32 %v134, %v129
    %v140 = vmul.f32 %v134, %v130
    %v141 = vmul.f32 %v134, %v131
    %v142 = vmul.f32 %v134, %v132
    %v143 = vsel %vm97, %v135, 0.0
    %144 = vadd.xlane.f32.xlu0 %v143
    %v145 = vpop.xlane.xlu0 %144
    %v146 = vsel %vm97, %v136, 0.0
    %147 = vadd.xlane.f32.xlu0 %v146
    %v148 = vpop.xlane.xlu0 %147
    %v149 = vsel %vm97, %v137, 0.0
    %150 = vadd.xlane.f32.xlu0 %v149
    %v151 = vpop.xlane.xlu0 %150
    %v152 = vsel %vm97, %v138, 0.0
    %153 = vadd.xlane.f32.xlu0 %v152
    %v154 = vpop.xlane.xlu0 %153
    %v155 = vsel %vm97, %v139, 0.0
    %156 = vadd.xlane.f32.xlu0 %v155
    %v157 = vpop.xlane.xlu0 %156
    %v158 = vsel %vm97, %v140, 0.0
    %159 = vadd.xlane.f32.xlu0 %v158
    %v160 = vpop.xlane.xlu0 %159
    %v161 = vsel %vm97, %v141, 0.0
    %162 = vadd.xlane.f32.xlu0 %v161
    %v163 = vpop.xlane.xlu0 %162
    %v164 = vsel %vm97, %v142, 0.0
    %165 = vadd.xlane.f32.xlu0 %v164
    %v166 = vpop.xlane.xlu0 %165
    %v167 = vld [vmem:[%s4] sm:$0xff]
    %v168 = vld [vmem:[%s4 + $0x8] sm:$0xff]
    %v169 = vld [vmem:[%s4 + $0x10] sm:$0xff]
    %v170 = vld [vmem:[%s4 + $0x18] sm:$0xff]
    %v171 = vadd.f32 %v145, %v167
    %v172 = vadd.f32 %v148, %v168
    %v173 = vadd.f32 %v151, %v169
    %v174 = vadd.f32 %v154, %v170
    %v175 = vadd.f32 %v157, %v167
    %v176 = vadd.f32 %v160, %v168
    %v177 = vadd.f32 %v163, %v169
    %v178 = vadd.f32 %v166, %v170
    %v179 = vxor.u32 %v171, 2147483648
    %v180 = vxor.u32 %v172, 2147483648
    %v181 = vxor.u32 %v173, 2147483648
    %v182 = vxor.u32 %v174, 2147483648
    %v183 = vxor.u32 %v175, 2147483648
    %v184 = vxor.u32 %v176, 2147483648
    %v185 = vxor.u32 %v177, 2147483648
    %v186 = vxor.u32 %v178, 2147483648
    %v187 = vmul.f32 %v179, 1.442695
    %v188 = vpow.pop %v187
    %v189 = vmul.f32 %v180, 1.442695
    %v190 = vpow.pop %v189
    %v191 = vmul.f32 %v181, 1.442695
    %v192 = vpow.pop %v191
    %v193 = vmul.f32 %v182, 1.442695
    %v194 = vpow.pop %v193
    %v195 = vmul.f32 %v183, 1.442695
    %v196 = vpow.pop %v195
    %v197 = vmul.f32 %v184, 1.442695
    %v198 = vpow.pop %v197
    %v199 = vmul.f32 %v185, 1.442695
    %v200 = vpow.pop %v199
    %v201 = vmul.f32 %v186, 1.442695
    %v202 = vpow.pop %v201
    %v203 = vadd.f32 %v188, 1.0
    %v204 = vadd.f32 %v190, 1.0
    %v205 = vadd.f32 %v192, 1.0
    %v206 = vadd.f32 %v194, 1.0
    %v207 = vadd.f32 %v196, 1.0
    %v208 = vadd.f32 %v198, 1.0
    %v209 = vadd.f32 %v200, 1.0
    %v210 = vadd.f32 %v202, 1.0
    %v211 = vrcp.pop %v203
    %v212 = vmul.f32 %v203, %v211
    %v213 = vsub.f32 1.0, %v212
    %v214 = vmul.f32 %v211, %v213
    %v215 = vadd.f32 %v211, %v214
    %vm216 = vweird.f32 %v203
    %vm217 = vweird.f32 %v211
    %vm218 = vmor %vm216, %vm217
    %v219 = vsel %vm218, %v211, %v215
    %v220 = vand.u32 2147483647, %v203
    %vm221 = vcmp.eq.f32.partialorder %v220, 8.507059e+37
    %v222 = vand.u32 %v203, 2147483648
    %v223 = vor.u32 1.1754944e-38, %v222
    %v224 = vsel %vm221, %v223, %v219
    %v225 = vmul.f32 1.0, %v224
    %v226 = vrcp.pop %v204
    %v227 = vmul.f32 %v204, %v226
    %v228 = vsub.f32 1.0, %v227
    %v229 = vmul.f32 %v226, %v228
    %v230 = vadd.f32 %v226, %v229
    %vm231 = vweird.f32 %v204
    %vm232 = vweird.f32 %v226
    %vm233 = vmor %vm231, %vm232
    %v234 = vsel %vm233, %v226, %v230
    %v235 = vand.u32 2147483647, %v204
    %vm236 = vcmp.eq.f32.partialorder %v235, 8.507059e+37
    %v237 = vand.u32 %v204, 2147483648
    %v238 = vor.u32 1.1754944e-38, %v237
    %v239 = vsel %vm236, %v238, %v234
    %v240 = vmul.f32 1.0, %v239
    %v241 = vrcp.pop %v205
    %v242 = vmul.f32 %v205, %v241
    %v243 = vsub.f32 1.0, %v242
    %v244 = vmul.f32 %v241, %v243
    %v245 = vadd.f32 %v241, %v244
    %vm246 = vweird.f32 %v205
    %vm247 = vweird.f32 %v241
    %vm248 = vmor %vm246, %vm247
    %v249 = vsel %vm248, %v241, %v245
    %v250 = vand.u32 2147483647, %v205
    %vm251 = vcmp.eq.f32.partialorder %v250, 8.507059e+37
    %v252 = vand.u32 %v205, 2147483648
    %v253 = vor.u32 1.1754944e-38, %v252
    %v254 = vsel %vm251, %v253, %v249
    %v255 = vmul.f32 1.0, %v254
    %v256 = vrcp.pop %v206
    %v257 = vmul.f32 %v206, %v256
    %v258 = vsub.f32 1.0, %v257
    %v259 = vmul.f32 %v256, %v258
    %v260 = vadd.f32 %v256, %v259
    %vm261 = vweird.f32 %v206
    %vm262 = vweird.f32 %v256
    %vm263 = vmor %vm261, %vm262
    %v264 = vsel %vm263, %v256, %v260
    %v265 = vand.u32 2147483647, %v206
    %vm266 = vcmp.eq.f32.partialorder %v265, 8.507059e+37
    %v267 = vand.u32 %v206, 2147483648
    %v268 = vor.u32 1.1754944e-38, %v267
    %v269 = vsel %vm266, %v268, %v264
    %v270 = vmul.f32 1.0, %v269
    %v271 = vrcp.pop %v207
    %v272 = vmul.f32 %v207, %v271
    %v273 = vsub.f32 1.0, %v272
    %v274 = vmul.f32 %v271, %v273
    %v275 = vadd.f32 %v271, %v274
    %vm276 = vweird.f32 %v207
    %vm277 = vweird.f32 %v271
    %vm278 = vmor %vm276, %vm277
    %v279 = vsel %vm278, %v271, %v275
    %v280 = vand.u32 2147483647, %v207
    %vm281 = vcmp.eq.f32.partialorder %v280, 8.507059e+37
    %v282 = vand.u32 %v207, 2147483648
    %v283 = vor.u32 1.1754944e-38, %v282
    %v284 = vsel %vm281, %v283, %v279
    %v285 = vmul.f32 1.0, %v284
    %v286 = vrcp.pop %v208
    %v287 = vmul.f32 %v208, %v286
    %v288 = vsub.f32 1.0, %v287
    %v289 = vmul.f32 %v286, %v288
    %v290 = vadd.f32 %v286, %v289
    %vm291 = vweird.f32 %v208
    %vm292 = vweird.f32 %v286
    %vm293 = vmor %vm291, %vm292
    %v294 = vsel %vm293, %v286, %v290
    %v295 = vand.u32 2147483647, %v208
    %vm296 = vcmp.eq.f32.partialorder %v295, 8.507059e+37
    %v297 = vand.u32 %v208, 2147483648
    %v298 = vor.u32 1.1754944e-38, %v297
    %v299 = vsel %vm296, %v298, %v294
    %v300 = vmul.f32 1.0, %v299
    %v301 = vrcp.pop %v209
    %v302 = vmul.f32 %v209, %v301
    %v303 = vsub.f32 1.0, %v302
    %v304 = vmul.f32 %v301, %v303
    %v305 = vadd.f32 %v301, %v304
    %vm306 = vweird.f32 %v209
    %vm307 = vweird.f32 %v301
    %vm308 = vmor %vm306, %vm307
    %v309 = vsel %vm308, %v301, %v305
    %v310 = vand.u32 2147483647, %v209
    %vm311 = vcmp.eq.f32.partialorder %v310, 8.507059e+37
    %v312 = vand.u32 %v209, 2147483648
    %v313 = vor.u32 1.1754944e-38, %v312
    %v314 = vsel %vm311, %v313, %v309
    %v315 = vmul.f32 1.0, %v314
    %v316 = vrcp.pop %v210
    %v317 = vmul.f32 %v210, %v316
    %v318 = vsub.f32 1.0, %v317
    %v319 = vmul.f32 %v316, %v318
    %v320 = vadd.f32 %v316, %v319
    %vm321 = vweird.f32 %v210
    %vm322 = vweird.f32 %v316
    %vm323 = vmor %vm321, %vm322
    %v324 = vsel %vm323, %v316, %v320
    %v325 = vand.u32 2147483647, %v210
    %vm326 = vcmp.eq.f32.partialorder %v325, 8.507059e+37
    %v327 = vand.u32 %v210, 2147483648
    %v328 = vor.u32 1.1754944e-38, %v327
    %v329 = vsel %vm326, %v328, %v324
    %v330 = vmul.f32 1.0, %v329
    %332 = vset.pattern.permute.xlu0 0
    %333 = vperm.xlu0 %332, %v225
    %v334 = vpop.permute.xlu0 %333
    %337 = vset.pattern.permute.xlu0 0
    %338 = vperm.xlu0 %337, %v240
    %v339 = vpop.permute.xlu0 %338
    %342 = vset.pattern.permute.xlu0 0
    %343 = vperm.xlu0 %342, %v255
    %v344 = vpop.permute.xlu0 %343
    %347 = vset.pattern.permute.xlu0 0
    %348 = vperm.xlu0 %347, %v270
    %v349 = vpop.permute.xlu0 %348
    %352 = vset.pattern.permute.xlu0 0
    %353 = vperm.xlu0 %352, %v285
    %v354 = vpop.permute.xlu0 %353
    %357 = vset.pattern.permute.xlu0 0
    %358 = vperm.xlu0 %357, %v300
    %v359 = vpop.permute.xlu0 %358
    %362 = vset.pattern.permute.xlu0 0
    %363 = vperm.xlu0 %362, %v315
    %v364 = vpop.permute.xlu0 %363
    %367 = vset.pattern.permute.xlu0 0
    %368 = vperm.xlu0 %367, %v330
    %v369 = vpop.permute.xlu0 %368
    %v371 = vmul.f32 %v37, %v334
    %v372 = vmul.f32 %v38, %v334
    %v373 = vmul.f32 %v39, %v339
    %v374 = vmul.f32 %v40, %v339
    %v375 = vmul.f32 %v41, %v344
    %v376 = vmul.f32 %v42, %v344
    %v377 = vmul.f32 %v43, %v349
    %v378 = vmul.f32 %v44, %v349
    %v379 = vmul.f32 %v45, %v354
    %v380 = vmul.f32 %v46, %v354
    %v381 = vmul.f32 %v47, %v359
    %v382 = vmul.f32 %v48, %v359
    %v383 = vmul.f32 %v49, %v364
    %v384 = vmul.f32 %v50, %v364
    %v385 = vmul.f32 %v51, %v369
    %v386 = vmul.f32 %v52, %v369
    %387 = vst [vmem:[#allocation5] sm:$0xff] %v371
    %388 = vst [vmem:[#allocation5 + $0x8] sm:$0xff] %v372
    %389 = vst [vmem:[#allocation5 + $0x10] sm:$0xff] %v373
    %390 = vst [vmem:[#allocation5 + $0x18] sm:$0xff] %v374
    %391 = vst [vmem:[#allocation5 + $0x20] sm:$0xff] %v375
    %392 = vst [vmem:[#allocation5 + $0x28] sm:$0xff] %v376
    %393 = vst [vmem:[#allocation5 + $0x30] sm:$0xff] %v377
    %394 = vst [vmem:[#allocation5 + $0x38] sm:$0xff] %v378
    %395 = vst [vmem:[#allocation5 + $0x40] sm:$0xff] %v379
    %396 = vst [vmem:[#allocation5 + $0x48] sm:$0xff] %v380
    %397 = vst [vmem:[#allocation5 + $0x50] sm:$0xff] %v381
    %398 = vst [vmem:[#allocation5 + $0x58] sm:$0xff] %v382
    %399 = vst [vmem:[#allocation5 + $0x60] sm:$0xff] %v383
    %400 = vst [vmem:[#allocation5 + $0x68] sm:$0xff] %v384
    %401 = vst [vmem:[#allocation5 + $0x70] sm:$0xff] %v385
    %402 = vst [vmem:[#allocation5 + $0x78] sm:$0xff] %v386
    // Predicated region
    $region26: #{tpu_custom_call.1} parent=1 // pred_check
      _
    $region27: #{tpu_custom_call.1} parent=1 // pred_check_branch
      %404 = sbr.rel (0) target = $region29
    $region28: #{tpu_custom_call.1} parent=1 // pred_region
      %406 = vsyncadd [#allocation4], 0
      %s407 = sshll.u32 [#allocation5], 4
      %s408 = int_to_ptr.vmem [resolvable:$true] %s407
      %s409 = sshll.u32 %s5, 4
      %s410 = int_to_ptr.hbm [resolvable:$true] %s409
      %415 = dma.vmem_to_hbm [thread:$0]  %s408, 2048, %s410, [#allocation4], 256, 256, 16
    $region29: #{tpu_custom_call.1} parent=1 // pred_fallthru
      _
    // Predicated region
    $region30: #{tpu_custom_call.1} parent=1 // pred_check
      _
    $region31: #{tpu_custom_call.1} parent=1 // pred_check_branch
      %417 = sbr.rel (0) target = $region33
    $region32: #{tpu_custom_call.1} parent=1 // pred_region
      %419 = dma.done [#allocation4], 2048
    $region33: #{tpu_custom_call.1} parent=1 // pred_fallthru
      _
    %420 = vsyncpa [#allocation3], 1
    %421 = vsyncpa [#allocation4], 1

</llo_original>
